<compile_context>
chip_gen: v5e
topology: v5e:2x2
jax: 0.10.0
libtpu: 0.0.40
codegen_flags: <defaults>
</compile_context>

<pallas_src>
import functools

import jax
import jax.numpy as jnp
from jax.experimental import pallas as pl
from jax.experimental.pallas import tpu as pltpu


def _round_up(v, m):
    return ((v + m - 1) // m) * m


# ---------------------------------------------------------------------------
# Pallas kernel: tiled banded-Toeplitz matmul (the whole convolution compute).
# ---------------------------------------------------------------------------
def _banded_matmul_kernel(xw_ref, band_ref, y_ref, acc_ref):
    """y[i_tile] += xw[i_tile, k_tile] @ band[k_tile] with f32 accumulation."""

    @pl.when(pl.program_id(1) == 0)
    def _init():
        acc_ref[...] = jnp.zeros_like(acc_ref)

    acc_ref[...] += jnp.dot(
        xw_ref[...], band_ref[...], preferred_element_type=jnp.float32
    )

    @pl.when(pl.program_id(1) == pl.num_programs(1) - 1)
    def _store():
        y_ref[...] = acc_ref[...].astype(y_ref.dtype)


# ---------------------------------------------------------------------------
# Wrapper glue (impulse + small banded Toeplitz + im2col) and pallas_call.
# ---------------------------------------------------------------------------
def _build_impulse(noise, decay, wet, length, sampling_rate):
    """build_impulse() of the PyTorch module, with overflow-safe softplus."""
    t = jnp.arange(length, dtype=jnp.float32) / jnp.float32(sampling_rate)
    a = jnp.logaddexp(0.0, -decay)              # stable softplus(-decay)
    imp = noise[:, 0] * jnp.exp(-a * t * 500.0) * jax.nn.sigmoid(wet)
    return imp.at[0].set(1.0)                   # impulse[:, 0] = 1


def _build_band(imp, K, T):
    """Banded Toeplitz B[r, c] = imp[c + K - r] (zero outside the band), (K+T, T)."""
    imp_pad = jnp.zeros((K,), jnp.float32).at[: imp.shape[0]].set(imp)
    r = jnp.arange(K + T, dtype=jnp.int32)[:, None]
    c = jnp.arange(T, dtype=jnp.int32)[None, :]
    k = c + K - r
    valid = (k >= 0) & (k < K)
    return jnp.where(valid, imp_pad[jnp.clip(k, 0, K - 1)], 0.0).astype(jnp.float32)


@functools.partial(jax.jit, static_argnames=("length", "sampling_rate"))
def reverb_forward(x, noise, decay, wet, *, length, sampling_rate):
    B, lenx, _ = x.shape
    if lenx < length:
        # F.pad with a negative pad (impulse truncation) is not supported here.
        raise ValueError(f"lenx ({lenx}) must be >= impulse length ({length}).")

    # Tile sizes: lane dims are 128-multiples (128 min for v5e MXU, 256 preferred
    # on v6e/v7x); all tiles are far below the v7x 64 MiB VMEM budget.
    T = min(256, _round_up(lenx, 128))          # output-time tile (N of the matmul)
    K = _round_up(length, T)                    # band width (>= impulse length)
    W = K + T                                   # im2col window / reduction extent
    tk = T                                      # reduction tile

    lenx_pad = _round_up(lenx, T)
    nT = lenx_pad // T

    imp = _build_impulse(noise, decay, wet, length, sampling_rate)   # (length,)
    band = _build_band(imp, K, T)                                    # (W, T)

    # im2col: row (b, j) holds x[b, j*T - K : j*T + T] (zero-padded), so every
    # output tile is one (W,)-row @ (W, T) band — the MXU M dim becomes B*nT.
    x2 = x[..., 0].astype(jnp.float32)                               # (B, lenx)
    x2p = jnp.pad(x2, ((0, 0), (K, lenx_pad - lenx)))                # (B, K+lenx_pad)
    idx = (jnp.arange(nT) * T)[:, None] + jnp.arange(W)[None, :]     # (nT, W)
    xw = x2p[:, idx].reshape(B * nT, W)                              # (B*nT, W)

    M_rows = B * nT
    tm = 256 if M_rows >= 256 else _round_up(M_rows, 8)
    Mpad = _round_up(M_rows, tm)
    xw = jnp.pad(xw, ((0, Mpad - M_rows), (0, 0)))                   # (Mpad, W)

    grid = (Mpad // tm, W // tk)                                     # reduction last
    flops = 2 * Mpad * W * T
    bytes_accessed = 4 * (Mpad * W + W * T * (Mpad // tm) + Mpad * T)

    y = pl.pallas_call(
        _banded_matmul_kernel,
        out_shape=jax.ShapeDtypeStruct((Mpad, T), jnp.float32),
        grid_spec=pltpu.PrefetchScalarGridSpec(
            num_scalar_prefetch=0,
            grid=grid,
            in_specs=[
                pl.BlockSpec((tm, tk), lambda i, k: (i, k)),   # im2col rows
                pl.BlockSpec((tk, T), lambda i, k: (k, 0)),    # banded Toeplitz
            ],
            out_specs=pl.BlockSpec((tm, T), lambda i, k: (i, 0)),
            scratch_shapes=[pltpu.VMEM((tm, T), jnp.float32)],
        ),
        compiler_params=pltpu.CompilerParams(
            dimension_semantics=("parallel", "arbitrary"),
            vmem_limit_bytes=32 * 1024 * 1024,
        ),
        cost_estimate=pl.CostEstimate(
            flops=int(flops), transcendentals=0, bytes_accessed=int(bytes_accessed)
        ),
    )(xw, band)

    y = y[:M_rows].reshape(B, nT * T)[:, :lenx]
    return y[..., None]                                              # (B, lenx, 1)


class ReverbPallas:
    """Forward-pass equivalent of the PyTorch Reverb module."""

    def __init__(self, length, sampling_rate, initial_wet=0.0, initial_decay=5.0,
                 key=None):
        self.length = int(length)
        self.sampling_rate = float(sampling_rate)
        key = jax.random.PRNGKey(0) if key is None else key
        # Parameter init mirrors the module: noise (length, 1) in [-1, 1); scalars.
        self.noise = (jax.random.uniform(key, (self.length, 1), dtype=jnp.float32)
                      * 2.0 - 1.0)
        self.decay = jnp.float32(initial_decay)
        self.wet = jnp.float32(initial_wet)

    def __call__(self, x):
        return reverb_forward(x, self.noise, self.decay, self.wet,
                              length=self.length, sampling_rate=self.sampling_rate)


# ---------------------------------------------------------------------------
# Pure-JAX reference (port of the PyTorch forward incl. fft_convolve).
# ---------------------------------------------------------------------------
def _reverb_reference(x, noise, decay, wet, length, sampling_rate):
    t = (jnp.arange(length, dtype=jnp.float32) / sampling_rate).reshape(1, -1, 1)
    sp = jax.nn.softplus(-decay)
    imp = noise[None] * jnp.exp(-sp * t * 500.0) * jax.nn.sigmoid(wet)
    imp = imp.at[:, 0].set(1.0)
    lenx = x.shape[1]
    imp = jnp.pad(imp, ((0, 0), (0, lenx - length), (0, 0)))
    sig = x[..., 0]                       # (B, lenx)
    ker = imp[..., 0]                     # (1, lenx)
    s = jnp.pad(sig, ((0, 0), (0, sig.shape[-1])))
    k = jnp.pad(ker, ((0, 0), (ker.shape[-1], 0)))
    out = jnp.fft.irfft(jnp.fft.rfft(s) * jnp.fft.rfft(k))
    out = out[..., out.shape[-1] // 2:]
    return out[..., None]


if __name__ == "__main__":
    length = 64
    sampling_rate = 16000
    batch = 2
    lenx = 128

    key = jax.random.PRNGKey(0)
    k_param, k_x = jax.random.split(key)

    reverb = ReverbPallas(length, sampling_rate, initial_wet=0.0, initial_decay=5.0,
                          key=k_param)
    x = jax.random.normal(k_x, (batch, lenx, 1), dtype=jnp.float32)

    y = reverb(x)
    y = jax.block_until_ready(y)

    y_ref = _reverb_reference(x, reverb.noise, reverb.decay, reverb.wet,
                              length, float(sampling_rate))
    assert y.shape == (batch, lenx, 1), y.shape
    assert jnp.allclose(y, y_ref, atol=2e-3, rtol=2e-3), float(
        jnp.max(jnp.abs(y - y_ref)))

    print("KERNEL_OK")
</pallas_src>

<mosaic_0001>
module attributes {stable_mosaic.version = 11 : i64} {
  func.func @_banded_matmul_kernel(%arg0: i32, %arg1: i32, %arg2: memref<8x128xf32, #tpu.memory_space<vmem>>, %arg3: memref<128x128xf32, #tpu.memory_space<vmem>>, %arg4: memref<8x128xf32, #tpu.memory_space<vmem>>, %arg5: memref<8x128xf32, #tpu.memory_space<vmem>>) attributes {dimension_semantics = [#tpu.dimension_semantics<parallel>, #tpu.dimension_semantics<arbitrary>], iteration_bounds = array<i64: 1, 2>, scalar_prefetch = 0 : i64, scratch_operands = 1 : i64, tpu.core_type = #tpu.core_type<tc>, window_params = [{transform_indices = @transform_0, window_bounds = array<i64: 8, 128>}, {transform_indices = @transform_1, window_bounds = array<i64: 128, 128>}, {transform_indices = @transform_2, window_bounds = array<i64: 8, 128>}]} {
    %c0_i32 = arith.constant 0 : i32
    %0 = arith.cmpi eq, %arg1, %c0_i32 : i32
    %1 = arith.extui %0 : i1 to i32
    %c0_i32_0 = arith.constant 0 : i32
    %2 = arith.cmpi ne, %1, %c0_i32_0 : i32
    scf.if %2 {
      %cst_9 = arith.constant 0.000000e+00 : f32
      %12 = vector.broadcast %cst_9 : f32 to vector<8x128xf32>
      %c0_10 = arith.constant 0 : index
      %c0_11 = arith.constant 0 : index
      %13 = vector.load %arg5[%c0_10, %c0_11] : memref<8x128xf32, #tpu.memory_space<vmem>>, vector<8x128xf32>
      tpu.vector_store %arg5[%c0_10, %c0_11], %12 {strides = array<i32>} : memref<8x128xf32, #tpu.memory_space<vmem>>, vector<8x128xf32>,
    } else {
    }
    %c0 = arith.constant 0 : index
    %c0_1 = arith.constant 0 : index
    %3 = vector.load %arg5[%c0, %c0_1] : memref<8x128xf32, #tpu.memory_space<vmem>>, vector<8x128xf32>
    %c0_2 = arith.constant 0 : index
    %c0_3 = arith.constant 0 : index
    %4 = vector.load %arg2[%c0_2, %c0_3] : memref<8x128xf32, #tpu.memory_space<vmem>>, vector<8x128xf32>
    %c0_4 = arith.constant 0 : index
    %c0_5 = arith.constant 0 : index
    %5 = vector.load %arg3[%c0_4, %c0_5] : memref<128x128xf32, #tpu.memory_space<vmem>>, vector<128x128xf32>
    %cst = arith.constant dense<0.000000e+00> : vector<8x128xf32>
    %6 = tpu.matmul %4, %5, %cst {dimension_numbers = #tpu.dot_dimension_numbers<[1], [0], [0], [1], [0, 0, 1, 1], [], []>} : vector<8x128xf32>, vector<128x128xf32>, vector<8x128xf32> -> vector<8x128xf32>
    %7 = arith.addf %3, %6 : vector<8x128xf32>
    %c0_6 = arith.constant 0 : index
    %c0_7 = arith.constant 0 : index
    %8 = vector.load %arg5[%c0_6, %c0_7] : memref<8x128xf32, #tpu.memory_space<vmem>>, vector<8x128xf32>
    tpu.vector_store %arg5[%c0_6, %c0_7], %7 {strides = array<i32>} : memref<8x128xf32, #tpu.memory_space<vmem>>, vector<8x128xf32>,
    %c1_i32 = arith.constant 1 : i32
    %9 = arith.cmpi eq, %arg1, %c1_i32 : i32
    %10 = arith.extui %9 : i1 to i32
    %c0_i32_8 = arith.constant 0 : i32
    %11 = arith.cmpi ne, %10, %c0_i32_8 : i32
    scf.if %11 {
      %c0_9 = arith.constant 0 : index
      %c0_10 = arith.constant 0 : index
      %12 = vector.load %arg5[%c0_9, %c0_10] : memref<8x128xf32, #tpu.memory_space<vmem>>, vector<8x128xf32>
      %c0_11 = arith.constant 0 : index
      %c0_12 = arith.constant 0 : index
      %13 = vector.load %arg4[%c0_11, %c0_12] : memref<8x128xf32, #tpu.memory_space<vmem>>, vector<8x128xf32>
      tpu.vector_store %arg4[%c0_11, %c0_12], %12 {strides = array<i32>} : memref<8x128xf32, #tpu.memory_space<vmem>>, vector<8x128xf32>,
    } else {
    }
    return
  }
  func.func @transform_0(%arg0: i32, %arg1: i32) -> (i32, i32) {
    %c0_i32 = arith.constant 0 : i32
    return %arg0, %arg1 : i32, i32
  }
  func.func @transform_1(%arg0: i32, %arg1: i32) -> (i32, i32) {
    %c0_i32 = arith.constant 0 : i32
    %c0_i32_0 = arith.constant 0 : i32
    return %arg1, %c0_i32 : i32, i32
  }
  func.func @transform_2(%arg0: i32, %arg1: i32) -> (i32, i32) {
    %c0_i32 = arith.constant 0 : i32
    %c0_i32_0 = arith.constant 0 : i32
    return %arg0, %c0_i32 : i32, i32
  }
}

</mosaic_0001>

<llo_original>
// kernel: reverb_forward.1
$region0: #{reverb_forward.1}
  #allocation0 [shape = 'u32[]', space=smem, size = 0x4, offset = 0x4, fixed_abs, tag = 'smem constant byte address 0x4 - core index']
  #allocation1 [shape = 'u32[72,128]{1,0:T(1,128)}', space=vmem, size = 0x9000, scoped, tag = 'internal scratch']
  #allocation2 [shape = 'f32[8,128]{1,0:T(8,128)}', space=vmem, size = 0x1000, scoped, tag = 'scratch operand']
  %s0 = inlined_call_operand.vmem [shape: f32[8,256], index: 0, kind: input, shape index: {}]
  %s1 = inlined_call_operand.vmem [shape: f32[256,128], index: 1, kind: input, shape index: {}]
  %s2 = inlined_call_operand.vmem [shape: f32[8,128], index: 2, kind: output, shape index: {}]
  %s3 = sld [smem:[#allocation0]]
  $region49: #{reverb_forward.1} parent=0
    _
  %s5 = ssub.s32 1, %s3
  %s6 = scalar_select 0, %s5, %s3
  loop: start=0, step=1, limit=4
  $region2: #{reverb_forward.1} parent=0 // loop_pre_header
    _
  $region3: #{reverb_forward.1} parent=0 // loop_header
    %s8 = sphi 0, %s12
    %p9 = scmp.ge.s32.totalorder %s8, 4
    %s15 = sphi 0, %s27
    %s16 = sphi 0, %s23
    %s17 = sphi 0, %s15
    %s18 = sphi 0, %s16
    %s19 = sphi 0, %s17
    %s20 = sphi 0, %s18
    %s32 = sphi 0, %s34
    %s35 = sphi 0, %s32
    %s36 = sphi 0, %s35
    %s52 = sphi 0, %s36
    %s58 = sphi 0, %s60
    %s61 = sphi 0, %s58
    %s62 = sphi 0, %s61
    %s78 = sphi 0, %s62
    %s84 = sphi 0, %s86
    %s87 = sphi 0, %s84
    %s88 = sphi 0, %s87
    %s104 = sphi 0, %s88
  $region4: #{reverb_forward.1} parent=0 // loop_header_branch
    %11 = sbr.rel (%p9) target = $region8
  $region5: #{reverb_forward.1} parent=0 // loop_body
    %s13 = ssub.s32 %s8, 1
    %s14 = ssub.s32 %s8, 2
    %s21 = sadd.s32 1, %s16
    %p22 = scmp.ge.s32.totalorder %s21, 2
    %s23 = scalar_select %p22, 0, %s21
    %s24 = sadd.s32 1, %s15
    %s25 = scalar_select %p22, %s24, %s15
    %p26 = scmp.ge.s32.totalorder %s25, 1
    %s27 = scalar_select %p26, 0, %s25
    %s28 = ssub.s32 %s15, %s27
    %s29 = ssub.s32 %s16, %s23
    %s30 = sor.u32 %s28, %s29
    %p31 = scmp.eq.s32.totalorder %s30, 0
    %s33 = sadd.s32 %s32, 1
    %s34 = scalar_select %p31, %s32, %s33
    %p37 = pneg %p31
    %p38 = scmp.eq.s32.totalorder %s8, 1
    %p39 = por %p37, %p38
    %p40 = scmp.ne.s32.totalorder %s32, %s35
    %p41 = scmp.eq.s32.totalorder %s8, 0
    %p42 = por %p40, %p41
    %p43 = scmp.ne.s32.totalorder %s32, %s35
    %p44 = scmp.eq.s32.totalorder %s13, 1
    %p45 = por %p43, %p44
    %p46 = scmp.ne.s32.totalorder %s35, %s36
    %p47 = scmp.eq.s32.totalorder %s13, 0
    %p48 = por %p46, %p47
    %p49 = scmp.ne.s32.totalorder %s35, %s36
    %p50 = scmp.eq.s32.totalorder %s14, 1
    %p51 = por %p49, %p50
    %p53 = scmp.ne.s32.totalorder %s36, %s52
    %p54 = scmp.eq.s32.totalorder %s14, 0
    %p55 = por %p53, %p54
    %s56 = ssub.s32 %s16, %s23
    %p57 = scmp.eq.s32.totalorder %s56, 0
    %s59 = sadd.s32 %s58, 1
    %s60 = scalar_select %p57, %s58, %s59
    %p63 = pneg %p57
    %p64 = scmp.eq.s32.totalorder %s8, 1
    %p65 = por %p63, %p64
    %p66 = scmp.ne.s32.totalorder %s58, %s61
    %p67 = scmp.eq.s32.totalorder %s8, 0
    %p68 = por %p66, %p67
    %p69 = scmp.ne.s32.totalorder %s58, %s61
    %p70 = scmp.eq.s32.totalorder %s13, 1
    %p71 = por %p69, %p70
    %p72 = scmp.ne.s32.totalorder %s61, %s62
    %p73 = scmp.eq.s32.totalorder %s13, 0
    %p74 = por %p72, %p73
    %p75 = scmp.ne.s32.totalorder %s61, %s62
    %p76 = scmp.eq.s32.totalorder %s14, 1
    %p77 = por %p75, %p76
    %p79 = scmp.ne.s32.totalorder %s62, %s78
    %p80 = scmp.eq.s32.totalorder %s14, 0
    %p81 = por %p79, %p80
    %s82 = ssub.s32 %s15, %s27
    %p83 = scmp.eq.s32.totalorder %s82, 0
    %s85 = sadd.s32 %s84, 1
    %s86 = scalar_select %p83, %s84, %s85
    %p89 = pneg %p83
    %p90 = scmp.eq.s32.totalorder %s8, 1
    %p91 = por %p89, %p90
    %p92 = scmp.ne.s32.totalorder %s84, %s87
    %p93 = scmp.eq.s32.totalorder %s8, 0
    %p94 = por %p92, %p93
    %p95 = scmp.ne.s32.totalorder %s84, %s87
    %p96 = scmp.eq.s32.totalorder %s13, 1
    %p97 = por %p95, %p96
    %p98 = scmp.ne.s32.totalorder %s87, %s88
    %p99 = scmp.eq.s32.totalorder %s13, 0
    %p100 = por %p98, %p99
    %p101 = scmp.ne.s32.totalorder %s87, %s88
    %p102 = scmp.eq.s32.totalorder %s14, 1
    %p103 = por %p101, %p102
    %p105 = scmp.ne.s32.totalorder %s88, %s104
    %p106 = scmp.eq.s32.totalorder %s14, 0
    %p107 = por %p105, %p106
    %p108 = scmp.le.s32.totalorder 1, %s8
    %p109 = scmp.lt.s32.totalorder %s8, 3
    %p110 = pnand %p108, %p109
    %p111 = pneg %p110
    // Predicated region
    $region9: #{reverb_forward.1} parent=5 // pred_check
      _
    $region10: #{reverb_forward.1} parent=5 // pred_check_branch
      %113 = sbr.rel (%p110) target = $region12
    $region11: #{reverb_forward.1} parent=5 // pred_region
      %s114 = ssub.s32 %s8, 1
    $region12: #{reverb_forward.1} parent=5 // pred_fallthru
      _
    %p115 = scmp.lt.s32.totalorder %s8, 2
    // Predicated region
    $region13: #{reverb_forward.1} parent=5 // pred_check
      %p116 = pneg %p115
    $region14: #{reverb_forward.1} parent=5 // pred_check_branch
      %118 = sbr.rel (%p116) target = $region16
    $region15: #{reverb_forward.1} parent=5 // pred_region
      // Predicated region
      $region17: #{reverb_forward.1} parent=15 // pred_check
        %p119 = pneg %p42
      $region18: #{reverb_forward.1} parent=15 // pred_check_branch
        %121 = sbr.rel (%p119) target = $region20
      $region19: #{reverb_forward.1} parent=15 // pred_region
        %p122 = scmp.lt.s32.totalorder %s15, 0
        %s123 = scalar_select %p122, %s15, 0
        %p124 = scmp.lt.s32.totalorder %s16, 1
        %s125 = scalar_select %p124, %s16, 1
        %s126 = smul.addr %s123, 2
        %s127 = sadd.s32 %s125, %s126
        %s128 = smul.addr %s127, 8
        %s129 = scalar_lea.vmem %s0, %s128
      $region20: #{reverb_forward.1} parent=15 // pred_fallthru
        _
      // Predicated region
      $region21: #{reverb_forward.1} parent=15 // pred_check
        %p130 = pneg %p68
      $region22: #{reverb_forward.1} parent=15 // pred_check_branch
        %132 = sbr.rel (%p130) target = $region24
      $region23: #{reverb_forward.1} parent=15 // pred_region
        %s133 = smul.u32 16, %s16
        %p134 = scmp.lt.s32.totalorder %s133, 31
        %s135 = scalar_select %p134, %s133, 31
        %s136 = smul.addr %s135, 8
        %s137 = scalar_lea.vmem %s1, %s136
        %s138 = smul.u32 16, %s16
      $region24: #{reverb_forward.1} parent=15 // pred_fallthru
        _
    $region16: #{reverb_forward.1} parent=5 // pred_fallthru
      _
    %p139 = scmp.le.s32.totalorder 1, %s8
    %p140 = scmp.lt.s32.totalorder %s8, 3
    %p141 = pnand %p139, %p140
    %p142 = pneg %p141
    // Predicated region
    $region25: #{reverb_forward.1} parent=5 // pred_check
      _
    $region26: #{reverb_forward.1} parent=5 // pred_check_branch
      %144 = sbr.rel (%p141) target = $region28
    $region27: #{reverb_forward.1} parent=5 // pred_region
      %s145 = ssub.s32 %s8, 1
      %p146 = scmp.lt.s32.totalorder %s17, 0
      %s147 = scalar_select %p146, %s17, 0
      %p148 = scmp.lt.s32.totalorder %s18, 1
      %s149 = scalar_select %p148, %s18, 1
      %s150 = smul.addr %s147, 2
      %s151 = sadd.s32 %s149, %s150
      %s152 = smul.addr %s151, 8
      %s153 = scalar_lea.vmem %s0, %s152
      %p154 = pneg %p48
      %p155 = pneg %p45
      %s156 = smul.u32 16, %s18
      %p157 = scmp.lt.s32.totalorder %s156, 31
      %s158 = scalar_select %p157, %s156, 31
      %s159 = smul.addr %s158, 8
      %s160 = scalar_lea.vmem %s1, %s159
      %p161 = pneg %p74
      %p162 = pneg %p71
      %p163 = pneg %p100
      %p164 = pneg %p97
      %p165 = scmp.lt.s32.totalorder %s17, 0
      %s166 = scalar_select %p165, %s17, 0
      %s167 = smul.addr %s166, 8
      %s168 = scalar_lea.vmem %s2, %s167
      %p169 = scmp.lt.s32.totalorder %s17, 0
      %s170 = scalar_select %p169, %s17, 0
      %p171 = scmp.lt.s32.totalorder %s18, 1
      %s172 = scalar_select %p171, %s18, 1
      %s173 = smul.addr %s170, 2
      %s174 = sadd.s32 %s172, %s173
      %s175 = smul.addr %s174, 8
      %s176 = scalar_lea.vmem %s0, %s175
      %s177 = smul.u32 16, %s18
      %p178 = scmp.lt.s32.totalorder %s177, 31
      %s179 = scalar_select %p178, %s177, 31
      %s180 = smul.addr %s179, 8
      %s181 = scalar_lea.vmem %s1, %s180
      %s182 = smul.u32 16, %s18
      %p183 = scmp.lt.s32.totalorder %s17, 0
      %s184 = scalar_select %p183, %s17, 0
      %s185 = smul.addr %s184, 8
      %s186 = scalar_lea.vmem %s2, %s185
      %p187 = scmp.eq.s32.totalorder %s18, 0
      // Predicated region
      $region29: #{reverb_forward.1} parent=27 // pred_check
        %p188 = pneg %p187
      $region30: #{reverb_forward.1} parent=27 // pred_check_branch
        %190 = sbr.rel (%p188) target = $region32
      $region31: #{reverb_forward.1} parent=27 // pred_region
        %191 = vst [vmem:[#allocation2] sm:$0xff] 0.0
      $region32: #{reverb_forward.1} parent=27 // pred_fallthru
        _
      %v192 = vld [vmem:[#allocation2] sm:$0xff]
      %v193 = vld [vmem:[%s176] sm:$0xff]
      %v194 = vld [vmem:[%s181] sm:$0xff]
      %v195 = vld [vmem:[%s181 + $0x8] sm:$0xff]
      %v196 = vld [vmem:[%s181 + $0x10] sm:$0xff]
      %v197 = vld [vmem:[%s181 + $0x18] sm:$0xff]
      %v198 = vld [vmem:[%s181 + $0x20] sm:$0xff]
      %v199 = vld [vmem:[%s181 + $0x28] sm:$0xff]
      %v200 = vld [vmem:[%s181 + $0x30] sm:$0xff]
      %v201 = vld [vmem:[%s181 + $0x38] sm:$0xff]
      %v202 = vld [vmem:[%s181 + $0x40] sm:$0xff]
      %v203 = vld [vmem:[%s181 + $0x48] sm:$0xff]
      %v204 = vld [vmem:[%s181 + $0x50] sm:$0xff]
      %v205 = vld [vmem:[%s181 + $0x58] sm:$0xff]
      %v206 = vld [vmem:[%s181 + $0x60] sm:$0xff]
      %v207 = vld [vmem:[%s181 + $0x68] sm:$0xff]
      %v208 = vld [vmem:[%s181 + $0x70] sm:$0xff]
      %v209 = vld [vmem:[%s181 + $0x78] sm:$0xff]
      %210 = vmatpush.msra.mxu0 %v209
      %211 = vmatpush.msra.mxu0 %v208
      %212 = vmatpush.msra.mxu0 %v207
      %213 = vmatpush.msra.mxu0 %v206
      %214 = vmatpush.msra.mxu0 %v205
      %215 = vmatpush.msra.mxu0 %v204
      %216 = vmatpush.msra.mxu0 %v203
      %217 = vmatpush.msra.mxu0 %v202
      %218 = vmatpush.msra.mxu0 %v201
      %219 = vmatpush.msra.mxu0 %v200
      %220 = vmatpush.msra.mxu0 %v199
      %221 = vmatpush.msra.mxu0 %v198
      %222 = vmatpush.msra.mxu0 %v197
      %223 = vmatpush.msra.mxu0 %v196
      %224 = vmatpush.msra.mxu0 %v195
      %225 = vmatpush.msra.mxu0 %v194
      %226 = vmatmul.f32.gmra.mxu0 %v193
      %v227 = vpop.f32.mrf.mxu0
      %v228 = vadd.f32 0.0, %v227
      %229 = vdwg.mxu0
      %v230 = vadd.f32 %v192, %v228
      %231 = vst [vmem:[#allocation2] sm:$0xff] %v230
      %p232 = scmp.eq.s32.totalorder %s18, 1
      // Predicated region
      $region33: #{reverb_forward.1} parent=27 // pred_check
        %p233 = pneg %p232
      $region34: #{reverb_forward.1} parent=27 // pred_check_branch
        %235 = sbr.rel (%p233) target = $region36
      $region35: #{reverb_forward.1} parent=27 // pred_region
        %v236 = vld [vmem:[#allocation2] sm:$0xff]
        %237 = vst [vmem:[%s186] sm:$0xff] %v236
      $region36: #{reverb_forward.1} parent=27 // pred_fallthru
        _
      %p238 = scmp.lt.s32.totalorder %s17, 0
      %s239 = scalar_select %p238, %s17, 0
      %s240 = smul.addr %s239, 8
      %s241 = scalar_lea.vmem %s2, %s240
      // Predicated region
      $region37: #{reverb_forward.1} parent=27 // pred_check
        %p242 = pneg %p97
      $region38: #{reverb_forward.1} parent=27 // pred_check_branch
        %244 = sbr.rel (%p242) target = $region40
      $region39: #{reverb_forward.1} parent=27 // pred_region
        _
      $region40: #{reverb_forward.1} parent=27 // pred_fallthru
        _
      // Predicated region
      $region41: #{reverb_forward.1} parent=27 // pred_check
        %p245 = pneg %p97
      $region42: #{reverb_forward.1} parent=27 // pred_check_branch
        %247 = sbr.rel (%p245) target = $region44
      $region43: #{reverb_forward.1} parent=27 // pred_region
        %p248 = scmp.lt.s32.totalorder %s17, 0
        %s249 = scalar_select %p248, %s17, 0
        %s250 = smul.addr %s249, 8
        %s251 = scalar_lea.vmem %s2, %s250
      $region44: #{reverb_forward.1} parent=27 // pred_fallthru
        _
    $region28: #{reverb_forward.1} parent=5 // pred_fallthru
      _
    %p252 = scmp.le.s32.totalorder 2, %s8
    // Predicated region
    $region45: #{reverb_forward.1} parent=5 // pred_check
      %p253 = pneg %p252
    $region46: #{reverb_forward.1} parent=5 // pred_check_branch
      %255 = sbr.rel (%p253) target = $region48
    $region47: #{reverb_forward.1} parent=5 // pred_region
      %s256 = ssub.s32 %s8, 2
    $region48: #{reverb_forward.1} parent=5 // pred_fallthru
      _
  $region6: #{reverb_forward.1} parent=0 // loop_footer
    %s12 = sadd.s32 1, %s8
  $region7: #{reverb_forward.1} parent=0 // loop_footer_branch
    %7 = sbr.rel target = $region3
  $region8: #{reverb_forward.1} parent=0 // loop_exit
    _

</llo_original>
